<compile_context>
chip_gen: v7x
topology: tpu7x:2x2x1
jax: 0.10.0
libtpu: 0.0.40
codegen_flags: <defaults>
</compile_context>

<pallas_src>
import jax
import jax.numpy as jnp
from jax.experimental import pallas as pl
from jax.experimental.pallas import tpu as pltpu


def _neurop_kernel(strength_ref,            # SMEM scalar-prefetch: (1,) f32
                   x_ref,                   # (1, in_nc, TM)   pixel tile
                   wc_ref,                  # (base_nf, in_nc) fused enc+mid, transposed
                   b0_ref,                  # (base_nf, 1)     fused bias
                   b1_ref,                  # (base_nf, 1)     strength gain (Wm col-sums)
                   wd_ref,                  # (out_nc, base_nf) decoder, transposed
                   bd_ref,                  # (out_nc, 1)
                   o_ref):                  # (1, out_nc, TM)
    x = x_ref[0].astype(jnp.float32)        # (in_nc, TM), pixels on lanes
    s = strength_ref[0]

    # fused encoder + operator strength + mid_conv
    h = jnp.dot(wc_ref[...], x, preferred_element_type=jnp.float32)
    h = h + b0_ref[...] + s * b1_ref[...]

    # LeakyReLU (PyTorch default negative_slope = 0.01)
    h = jnp.where(h >= 0, h, jnp.float32(0.01) * h)

    # decoder
    y = jnp.dot(wd_ref[...], h, preferred_element_type=jnp.float32) + bd_ref[...]
    o_ref[0] = y.astype(o_ref.dtype)


def neurop_operator(x_nchw, operator_strength, params, *, tile_m=2048):
    """x_nchw: (B, in_nc, H, W); operator_strength: scalar (broadcast add)."""
    # NOTE: operator_strength is treated as a single scalar broadcast over all
    # pixels (matches the PyTorch forward). A per-sample strength would become
    # a (B,) scalar-prefetch array indexed by the batch grid axis.
    we, be, wm, bm, wd, bd = params
    in_nc, base_nf = we.shape
    out_nc = wd.shape[1]

    B, C, H, W = x_nchw.shape
    assert C == in_nc
    HW = H * W

    # ---- pre-fuse encoder + mid_conv (both linear, nothing in between) ----
    f32 = jnp.float32
    wc = we.astype(f32) @ wm.astype(f32)                       # (in_nc, base_nf)
    b0 = be.astype(f32) @ wm.astype(f32) + bm.astype(f32)      # (1, base_nf)
    b1 = jnp.sum(wm.astype(f32), axis=0, keepdims=True)        # (1, base_nf)

    # Transpose for the pixels-on-lanes orientation (W^T @ x_tile).
    wc_t = wc.T                                                # (base_nf, in_nc)
    wd_t = wd.astype(f32).T                                    # (out_nc, base_nf)
    b0_c = b0.T                                                # (base_nf, 1)
    b1_c = b1.T                                                # (base_nf, 1)
    bd_c = bd.astype(f32).T                                    # (out_nc, 1)

    # NCHW -> (B, C, HW): pure reshape, no HBM transpose round-trip.
    x_p = x_nchw.reshape(B, in_nc, HW)

    # Lane-aligned pixel tile; don't over-pad tiny inputs.
    tile_m = min(tile_m, pl.cdiv(HW, 128) * 128)
    HW_pad = pl.cdiv(HW, tile_m) * tile_m
    if HW_pad != HW:
        x_p = jnp.pad(x_p, ((0, 0), (0, 0), (0, HW_pad - HW)))

    strength = jnp.reshape(jnp.asarray(operator_strength, jnp.float32), (1,))
    grid = (B, HW_pad // tile_m)

    y_p = pl.pallas_call(
        _neurop_kernel,
        out_shape=jax.ShapeDtypeStruct((B, out_nc, HW_pad), x_nchw.dtype),
        grid_spec=pltpu.PrefetchScalarGridSpec(
            num_scalar_prefetch=1,
            grid=grid,
            in_specs=[
                pl.BlockSpec((1, in_nc, tile_m), lambda b, i, s: (b, 0, i)),   # x tile
                pl.BlockSpec((base_nf, in_nc), lambda b, i, s: (0, 0)),        # Wc^T
                pl.BlockSpec((base_nf, 1), lambda b, i, s: (0, 0)),            # b0
                pl.BlockSpec((base_nf, 1), lambda b, i, s: (0, 0)),            # b1
                pl.BlockSpec((out_nc, base_nf), lambda b, i, s: (0, 0)),       # Wd^T
                pl.BlockSpec((out_nc, 1), lambda b, i, s: (0, 0)),             # bd
            ],
            out_specs=pl.BlockSpec((1, out_nc, tile_m), lambda b, i, s: (b, 0, i)),
        ),
        compiler_params=pltpu.CompilerParams(
            dimension_semantics=("parallel", "parallel")),
    )(strength, x_p, wc_t, b0_c, b1_c, wd_t, bd_c)

    y = y_p[:, :, :HW].reshape(B, out_nc, H, W)
    return y


def init_params(key, in_nc=3, out_nc=3, base_nf=64, dtype=jnp.float32):
    """Deterministic synthetic weights. PyTorch conv weight (out,in,1,1) is
    stored here as (in, out) so the reference can right-multiply."""
    ks = jax.random.split(key, 6)
    we = jax.random.normal(ks[0], (in_nc, base_nf), dtype) * 0.1
    be = jax.random.normal(ks[1], (1, base_nf), dtype) * 0.1
    wm = jax.random.normal(ks[2], (base_nf, base_nf), dtype) * 0.1
    bm = jax.random.normal(ks[3], (1, base_nf), dtype) * 0.1
    wd = jax.random.normal(ks[4], (base_nf, out_nc), dtype) * 0.1
    bd = jax.random.normal(ks[5], (1, out_nc), dtype) * 0.1
    return (we, be, wm, bm, wd, bd)


def _reference(x_nchw, strength, params):
    """Pure-JAX reference mirroring the (unfused) PyTorch forward."""
    we, be, wm, bm, wd, bd = params
    x = jnp.transpose(x_nchw, (0, 2, 3, 1))            # NHWC
    h = x @ we + be + strength                          # encoder + strength
    h = h @ wm + bm                                     # mid_conv
    h = jnp.where(h >= 0, h, 0.01 * h)                  # LeakyReLU
    y = h @ wd + bd                                     # decoder
    return jnp.transpose(y, (0, 3, 1, 2))


if __name__ == "__main__":
    key = jax.random.PRNGKey(0)
    k_x, k_p, k_s = jax.random.split(key, 3)

    B, in_nc, H, W = 2, 3, 16, 16
    x = jax.random.normal(k_x, (B, in_nc, H, W), jnp.float32)
    params = init_params(k_p, in_nc=3, out_nc=3, base_nf=64)
    strength = jax.random.normal(k_s, (), jnp.float32)  # scalar operator strength

    y = neurop_operator(x, strength, params)
    y = jax.block_until_ready(y)

    y_ref = _reference(x, strength, params)
    assert y.shape == (B, 3, H, W)
    # Encoder/mid_conv pre-fusion changes f32 rounding order slightly.
    assert jnp.allclose(y, y_ref, atol=1e-4, rtol=1e-4)

    print("KERNEL_OK")
</pallas_src>

<mosaic_0001>
module attributes {stable_mosaic.version = 11 : i64} {
  func.func @_neurop_kernel(%arg0: i32, %arg1: i32, %arg2: memref<1xf32, #tpu.memory_space<smem>>, %arg3: memref<1x3x256xf32, #tpu.memory_space<vmem>>, %arg4: memref<64x3xf32, #tpu.memory_space<vmem>>, %arg5: memref<64x1xf32, #tpu.memory_space<vmem>>, %arg6: memref<64x1xf32, #tpu.memory_space<vmem>>, %arg7: memref<3x64xf32, #tpu.memory_space<vmem>>, %arg8: memref<3x1xf32, #tpu.memory_space<vmem>>, %arg9: memref<1x3x256xf32, #tpu.memory_space<vmem>>) attributes {dimension_semantics = [#tpu.dimension_semantics<parallel>, #tpu.dimension_semantics<parallel>], iteration_bounds = array<i64: 2, 1>, scalar_prefetch = 1 : i64, scratch_operands = 0 : i64, tpu.core_type = #tpu.core_type<tc>, window_params = [{transform_indices = @transform_0, window_bounds = array<i64: 1, 3, 256>}, {pipeline_mode = #tpu.pipeline_mode<synchronous>, transform_indices = @transform_1, window_bounds = array<i64: 64, 3>}, {pipeline_mode = #tpu.pipeline_mode<synchronous>, transform_indices = @transform_2, window_bounds = array<i64: 64, 1>}, {pipeline_mode = #tpu.pipeline_mode<synchronous>, transform_indices = @transform_3, window_bounds = array<i64: 64, 1>}, {pipeline_mode = #tpu.pipeline_mode<synchronous>, transform_indices = @transform_4, window_bounds = array<i64: 3, 64>}, {pipeline_mode = #tpu.pipeline_mode<synchronous>, transform_indices = @transform_5, window_bounds = array<i64: 3, 1>}, {transform_indices = @transform_6, window_bounds = array<i64: 1, 3, 256>}]} {
    %c0 = arith.constant 0 : index
    %c0_0 = arith.constant 0 : index
    %c0_1 = arith.constant 0 : index
    %0 = vector.load %arg3[%c0, %c0_0, %c0_1] : memref<1x3x256xf32, #tpu.memory_space<vmem>>, vector<1x3x256xf32>
    %1 = vector.shape_cast %0 : vector<1x3x256xf32> to vector<3x256xf32>
    %c0_2 = arith.constant 0 : index
    %2 = memref.load %arg2[%c0_2] : memref<1xf32, #tpu.memory_space<smem>>
    %c0_3 = arith.constant 0 : index
    %c0_4 = arith.constant 0 : index
    %3 = vector.load %arg4[%c0_3, %c0_4] : memref<64x3xf32, #tpu.memory_space<vmem>>, vector<64x3xf32>
    %cst = arith.constant dense<0.000000e+00> : vector<64x256xf32>
    %4 = tpu.matmul %3, %1, %cst {dimension_numbers = #tpu.dot_dimension_numbers<[1], [0], [0], [1], [0, 0, 1, 1], [], []>} : vector<64x3xf32>, vector<3x256xf32>, vector<64x256xf32> -> vector<64x256xf32>
    %c0_5 = arith.constant 0 : index
    %c0_6 = arith.constant 0 : index
    %5 = vector.load %arg5[%c0_5, %c0_6] : memref<64x1xf32, #tpu.memory_space<vmem>>, vector<64x1xf32>
    %6 = vector.broadcast %5 : vector<64x1xf32> to vector<64x256xf32>
    %7 = arith.addf %4, %6 : vector<64x256xf32>
    %c0_7 = arith.constant 0 : index
    %c0_8 = arith.constant 0 : index
    %8 = vector.load %arg6[%c0_7, %c0_8] : memref<64x1xf32, #tpu.memory_space<vmem>>, vector<64x1xf32>
    %9 = vector.broadcast %2 : f32 to vector<64x1xf32>
    %10 = arith.mulf %9, %8 : vector<64x1xf32>
    %11 = vector.broadcast %10 : vector<64x1xf32> to vector<64x256xf32>
    %12 = arith.addf %7, %11 : vector<64x256xf32>
    %cst_9 = arith.constant 0.000000e+00 : f32
    %13 = vector.broadcast %cst_9 : f32 to vector<64x256xf32>
    %14 = arith.cmpf oge, %12, %13 : vector<64x256xf32>
    %cst_10 = arith.constant 0.00999999977 : f32
    %15 = vector.broadcast %cst_10 : f32 to vector<64x256xf32>
    %16 = arith.mulf %15, %12 : vector<64x256xf32>
    %17 = arith.select %14, %12, %16 : vector<64x256xi1>, vector<64x256xf32>
    %c0_11 = arith.constant 0 : index
    %c0_12 = arith.constant 0 : index
    %18 = vector.load %arg7[%c0_11, %c0_12] : memref<3x64xf32, #tpu.memory_space<vmem>>, vector<3x64xf32>
    %cst_13 = arith.constant dense<0.000000e+00> : vector<3x256xf32>
    %19 = tpu.matmul %18, %17, %cst_13 {dimension_numbers = #tpu.dot_dimension_numbers<[1], [0], [0], [1], [0, 0, 1, 1], [], []>} : vector<3x64xf32>, vector<64x256xf32>, vector<3x256xf32> -> vector<3x256xf32>
    %c0_14 = arith.constant 0 : index
    %c0_15 = arith.constant 0 : index
    %20 = vector.load %arg8[%c0_14, %c0_15] : memref<3x1xf32, #tpu.memory_space<vmem>>, vector<3x1xf32>
    %21 = vector.broadcast %20 : vector<3x1xf32> to vector<3x256xf32>
    %22 = arith.addf %19, %21 : vector<3x256xf32>
    %c0_16 = arith.constant 0 : index
    %c0_17 = arith.constant 0 : index
    %c0_18 = arith.constant 0 : index
    %23 = vector.load %arg9[%c0_16, %c0_17, %c0_18] : memref<1x3x256xf32, #tpu.memory_space<vmem>>, vector<1x3x256xf32>
    %24 = vector.shape_cast %23 : vector<1x3x256xf32> to vector<3x256xf32>
    %25 = vector.shape_cast %22 : vector<3x256xf32> to vector<1x3x256xf32>
    tpu.vector_store %arg9[%c0_16, %c0_17, %c0_18], %25 {strides = array<i32>} : memref<1x3x256xf32, #tpu.memory_space<vmem>>, vector<1x3x256xf32>,
    return
  }
  func.func @transform_0(%arg0: i32, %arg1: i32, %arg2: memref<1xf32, #tpu.memory_space<smem>>) -> (i32, i32, i32) {
    %c0_i32 = arith.constant 0 : i32
    %c0_i32_0 = arith.constant 0 : i32
    return %arg0, %c0_i32, %arg1 : i32, i32, i32
  }
  func.func @transform_1(%arg0: i32, %arg1: i32, %arg2: memref<1xf32, #tpu.memory_space<smem>>) -> (i32, i32) {
    %c0_i32 = arith.constant 0 : i32
    %c0_i32_0 = arith.constant 0 : i32
    %c0_i32_1 = arith.constant 0 : i32
    return %c0_i32, %c0_i32_0 : i32, i32
  }
  func.func @transform_2(%arg0: i32, %arg1: i32, %arg2: memref<1xf32, #tpu.memory_space<smem>>) -> (i32, i32) {
    %c0_i32 = arith.constant 0 : i32
    %c0_i32_0 = arith.constant 0 : i32
    %c0_i32_1 = arith.constant 0 : i32
    return %c0_i32, %c0_i32_0 : i32, i32
  }
  func.func @transform_3(%arg0: i32, %arg1: i32, %arg2: memref<1xf32, #tpu.memory_space<smem>>) -> (i32, i32) {
    %c0_i32 = arith.constant 0 : i32
    %c0_i32_0 = arith.constant 0 : i32
    %c0_i32_1 = arith.constant 0 : i32
    return %c0_i32, %c0_i32_0 : i32, i32
  }
  func.func @transform_4(%arg0: i32, %arg1: i32, %arg2: memref<1xf32, #tpu.memory_space<smem>>) -> (i32, i32) {
    %c0_i32 = arith.constant 0 : i32
    %c0_i32_0 = arith.constant 0 : i32
    %c0_i32_1 = arith.constant 0 : i32
    return %c0_i32, %c0_i32_0 : i32, i32
  }
  func.func @transform_5(%arg0: i32, %arg1: i32, %arg2: memref<1xf32, #tpu.memory_space<smem>>) -> (i32, i32) {
    %c0_i32 = arith.constant 0 : i32
    %c0_i32_0 = arith.constant 0 : i32
    %c0_i32_1 = arith.constant 0 : i32
    return %c0_i32, %c0_i32_0 : i32, i32
  }
  func.func @transform_6(%arg0: i32, %arg1: i32, %arg2: memref<1xf32, #tpu.memory_space<smem>>) -> (i32, i32, i32) {
    %c0_i32 = arith.constant 0 : i32
    %c0_i32_0 = arith.constant 0 : i32
    return %arg0, %c0_i32, %arg1 : i32, i32, i32
  }
}

</mosaic_0001>

<llo_original>
// kernel: tpu_custom_call.1
$region0: #{tpu_custom_call.1}
  #allocation0 [shape = 'u32[]', space=smem, size = 0x4, offset = 0x4, fixed_abs, tag = 'smem constant byte address 0x4 - core index']
  #allocation1 [shape = 'u32[144,128]{1,0:T(1,128)}', space=vmem, size = 0x12000, scoped, tag = 'internal scratch']
  #allocation2 [shape = 's32[1]{0}', space=sflag, size = 0x4, scoped, tag = 'scoped memory for tpu_custom_call.1']
  #allocation3 [shape = 'f32[1]{0:T(128)S(6)}', space=smem, size = 0x200, scoped, tag = 'prefetched SMEM operand 0']
  %s0 = inlined_call_operand.<no memory space> [shape: f32[1], index: 0, kind: input, shape index: {}]
  %s1 = inlined_call_operand.vmem [shape: f32[2,3,256], index: 1, kind: input, shape index: {}]
  %s2 = inlined_call_operand.vmem [shape: f32[64,3], index: 2, kind: input, shape index: {}]
  %s3 = inlined_call_operand.vmem [shape: f32[64,1], index: 3, kind: input, shape index: {}]
  %s4 = inlined_call_operand.vmem [shape: f32[64,1], index: 4, kind: input, shape index: {}]
  %s5 = inlined_call_operand.vmem [shape: f32[3,64], index: 5, kind: input, shape index: {}]
  %s6 = inlined_call_operand.vmem [shape: f32[3,1], index: 6, kind: input, shape index: {}]
  %s7 = inlined_call_operand.vmem [shape: f32[2,3,256], index: 7, kind: output, shape index: {}]
  %s8 = sld [smem:[#allocation0]]
  $region57: #{tpu_custom_call.1} parent=0
    _
  %s10 = ssub.s32 1, %s8
  %s11 = scalar_select 0, %s10, %s8
  %12 = sst [smem:[#allocation3]] %s0
  loop: start=0, step=1, limit=4
  $region2: #{tpu_custom_call.1} parent=0 // loop_pre_header
    _
  $region3: #{tpu_custom_call.1} parent=0 // loop_header
    %s14 = sphi 0, %s18
    %p15 = scmp.ge.s32.totalorder %s14, 4
    %s21 = sphi 0, %s33
    %s22 = sphi 0, %s29
    %s23 = sphi 0, %s21
    %s24 = sphi 0, %s22
    %s25 = sphi 0, %s23
    %s26 = sphi 0, %s24
    %s38 = sphi 0, %s40
    %s41 = sphi 0, %s38
    %s42 = sphi 0, %s41
    %s58 = sphi 0, %s42
    %s62 = sphi 0, %s62
    %s64 = sphi 0, %s62
    %s65 = sphi 0, %s64
    %s79 = sphi 0, %s65
    %s83 = sphi 0, %s83
    %s85 = sphi 0, %s83
    %s86 = sphi 0, %s85
    %s100 = sphi 0, %s86
    %s104 = sphi 0, %s104
    %s106 = sphi 0, %s104
    %s107 = sphi 0, %s106
    %s121 = sphi 0, %s107
    %s125 = sphi 0, %s125
    %s127 = sphi 0, %s125
    %s128 = sphi 0, %s127
    %s142 = sphi 0, %s128
    %s146 = sphi 0, %s146
    %s148 = sphi 0, %s146
    %s149 = sphi 0, %s148
    %s163 = sphi 0, %s149
    %s171 = sphi 0, %s173
    %s174 = sphi 0, %s171
    %s175 = sphi 0, %s174
    %s191 = sphi 0, %s175
  $region4: #{tpu_custom_call.1} parent=0 // loop_header_branch
    %17 = sbr.rel (%p15) target = $region8
  $region5: #{tpu_custom_call.1} parent=0 // loop_body
    %s19 = ssub.s32 %s14, 1
    %s20 = ssub.s32 %s14, 2
    %s27 = sadd.s32 1, %s22
    %p28 = scmp.ge.s32.totalorder %s27, 1
    %s29 = scalar_select %p28, 0, %s27
    %s30 = sadd.s32 1, %s21
    %s31 = scalar_select %p28, %s30, %s21
    %p32 = scmp.ge.s32.totalorder %s31, 2
    %s33 = scalar_select %p32, 0, %s31
    %s34 = ssub.s32 %s21, %s33
    %s35 = ssub.s32 %s22, %s29
    %s36 = sor.u32 %s34, %s35
    %p37 = scmp.eq.s32.totalorder %s36, 0
    %s39 = sadd.s32 %s38, 1
    %s40 = scalar_select %p37, %s38, %s39
    %p43 = pneg %p37
    %p44 = scmp.eq.s32.totalorder %s14, 1
    %p45 = por %p43, %p44
    %p46 = scmp.ne.s32.totalorder %s38, %s41
    %p47 = scmp.eq.s32.totalorder %s14, 0
    %p48 = por %p46, %p47
    %p49 = scmp.ne.s32.totalorder %s38, %s41
    %p50 = scmp.eq.s32.totalorder %s19, 1
    %p51 = por %p49, %p50
    %p52 = scmp.ne.s32.totalorder %s41, %s42
    %p53 = scmp.eq.s32.totalorder %s19, 0
    %p54 = por %p52, %p53
    %p55 = scmp.ne.s32.totalorder %s41, %s42
    %p56 = scmp.eq.s32.totalorder %s20, 1
    %p57 = por %p55, %p56
    %p59 = scmp.ne.s32.totalorder %s42, %s58
    %p60 = scmp.eq.s32.totalorder %s20, 0
    %p61 = por %p59, %p60
    %s63 = sadd.s32 %s62, 1
    %p66 = scmp.eq.s32.totalorder %s14, 1
    %p67 = scmp.ne.s32.totalorder %s62, %s64
    %p68 = scmp.eq.s32.totalorder %s14, 0
    %p69 = por %p67, %p68
    %p70 = scmp.ne.s32.totalorder %s62, %s64
    %p71 = scmp.eq.s32.totalorder %s19, 1
    %p72 = por %p70, %p71
    %p73 = scmp.ne.s32.totalorder %s64, %s65
    %p74 = scmp.eq.s32.totalorder %s19, 0
    %p75 = por %p73, %p74
    %p76 = scmp.ne.s32.totalorder %s64, %s65
    %p77 = scmp.eq.s32.totalorder %s20, 1
    %p78 = por %p76, %p77
    %p80 = scmp.ne.s32.totalorder %s65, %s79
    %p81 = scmp.eq.s32.totalorder %s20, 0
    %p82 = por %p80, %p81
    %s84 = sadd.s32 %s83, 1
    %p87 = scmp.eq.s32.totalorder %s14, 1
    %p88 = scmp.ne.s32.totalorder %s83, %s85
    %p89 = scmp.eq.s32.totalorder %s14, 0
    %p90 = por %p88, %p89
    %p91 = scmp.ne.s32.totalorder %s83, %s85
    %p92 = scmp.eq.s32.totalorder %s19, 1
    %p93 = por %p91, %p92
    %p94 = scmp.ne.s32.totalorder %s85, %s86
    %p95 = scmp.eq.s32.totalorder %s19, 0
    %p96 = por %p94, %p95
    %p97 = scmp.ne.s32.totalorder %s85, %s86
    %p98 = scmp.eq.s32.totalorder %s20, 1
    %p99 = por %p97, %p98
    %p101 = scmp.ne.s32.totalorder %s86, %s100
    %p102 = scmp.eq.s32.totalorder %s20, 0
    %p103 = por %p101, %p102
    %s105 = sadd.s32 %s104, 1
    %p108 = scmp.eq.s32.totalorder %s14, 1
    %p109 = scmp.ne.s32.totalorder %s104, %s106
    %p110 = scmp.eq.s32.totalorder %s14, 0
    %p111 = por %p109, %p110
    %p112 = scmp.ne.s32.totalorder %s104, %s106
    %p113 = scmp.eq.s32.totalorder %s19, 1
    %p114 = por %p112, %p113
    %p115 = scmp.ne.s32.totalorder %s106, %s107
    %p116 = scmp.eq.s32.totalorder %s19, 0
    %p117 = por %p115, %p116
    %p118 = scmp.ne.s32.totalorder %s106, %s107
    %p119 = scmp.eq.s32.totalorder %s20, 1
    %p120 = por %p118, %p119
    %p122 = scmp.ne.s32.totalorder %s107, %s121
    %p123 = scmp.eq.s32.totalorder %s20, 0
    %p124 = por %p122, %p123
    %s126 = sadd.s32 %s125, 1
    %p129 = scmp.eq.s32.totalorder %s14, 1
    %p130 = scmp.ne.s32.totalorder %s125, %s127
    %p131 = scmp.eq.s32.totalorder %s14, 0
    %p132 = por %p130, %p131
    %p133 = scmp.ne.s32.totalorder %s125, %s127
    %p134 = scmp.eq.s32.totalorder %s19, 1
    %p135 = por %p133, %p134
    %p136 = scmp.ne.s32.totalorder %s127, %s128
    %p137 = scmp.eq.s32.totalorder %s19, 0
    %p138 = por %p136, %p137
    %p139 = scmp.ne.s32.totalorder %s127, %s128
    %p140 = scmp.eq.s32.totalorder %s20, 1
    %p141 = por %p139, %p140
    %p143 = scmp.ne.s32.totalorder %s128, %s142
    %p144 = scmp.eq.s32.totalorder %s20, 0
    %p145 = por %p143, %p144
    %s147 = sadd.s32 %s146, 1
    %p150 = scmp.eq.s32.totalorder %s14, 1
    %p151 = scmp.ne.s32.totalorder %s146, %s148
    %p152 = scmp.eq.s32.totalorder %s14, 0
    %p153 = por %p151, %p152
    %p154 = scmp.ne.s32.totalorder %s146, %s148
    %p155 = scmp.eq.s32.totalorder %s19, 1
    %p156 = por %p154, %p155
    %p157 = scmp.ne.s32.totalorder %s148, %s149
    %p158 = scmp.eq.s32.totalorder %s19, 0
    %p159 = por %p157, %p158
    %p160 = scmp.ne.s32.totalorder %s148, %s149
    %p161 = scmp.eq.s32.totalorder %s20, 1
    %p162 = por %p160, %p161
    %p164 = scmp.ne.s32.totalorder %s149, %s163
    %p165 = scmp.eq.s32.totalorder %s20, 0
    %p166 = por %p164, %p165
    %s167 = ssub.s32 %s21, %s33
    %s168 = ssub.s32 %s22, %s29
    %s169 = sor.u32 %s167, %s168
    %p170 = scmp.eq.s32.totalorder %s169, 0
    %s172 = sadd.s32 %s171, 1
    %s173 = scalar_select %p170, %s171, %s172
    %p176 = pneg %p170
    %p177 = scmp.eq.s32.totalorder %s14, 1
    %p178 = por %p176, %p177
    %p179 = scmp.ne.s32.totalorder %s171, %s174
    %p180 = scmp.eq.s32.totalorder %s14, 0
    %p181 = por %p179, %p180
    %p182 = scmp.ne.s32.totalorder %s171, %s174
    %p183 = scmp.eq.s32.totalorder %s19, 1
    %p184 = por %p182, %p183
    %p185 = scmp.ne.s32.totalorder %s174, %s175
    %p186 = scmp.eq.s32.totalorder %s19, 0
    %p187 = por %p185, %p186
    %p188 = scmp.ne.s32.totalorder %s174, %s175
    %p189 = scmp.eq.s32.totalorder %s20, 1
    %p190 = por %p188, %p189
    %p192 = scmp.ne.s32.totalorder %s175, %s191
    %p193 = scmp.eq.s32.totalorder %s20, 0
    %p194 = por %p192, %p193
    %p195 = scmp.le.s32.totalorder 1, %s14
    %p196 = scmp.lt.s32.totalorder %s14, 3
    %p197 = pnand %p195, %p196
    %p198 = pneg %p197
    // Predicated region
    $region9: #{tpu_custom_call.1} parent=5 // pred_check
      _
    $region10: #{tpu_custom_call.1} parent=5 // pred_check_branch
      %200 = sbr.rel (%p197) target = $region12
    $region11: #{tpu_custom_call.1} parent=5 // pred_region
      %s201 = ssub.s32 %s14, 1
      // Predicated region
      $region13: #{tpu_custom_call.1} parent=11 // pred_check
        %p202 = pneg %p75
      $region14: #{tpu_custom_call.1} parent=11 // pred_check_branch
        %204 = sbr.rel (%p202) target = $region16
      $region15: #{tpu_custom_call.1} parent=11 // pred_region
        _
      $region16: #{tpu_custom_call.1} parent=11 // pred_fallthru
        _
      // Predicated region
      $region17: #{tpu_custom_call.1} parent=11 // pred_check
        %p205 = pneg %p96
      $region18: #{tpu_custom_call.1} parent=11 // pred_check_branch
        %207 = sbr.rel (%p205) target = $region20
      $region19: #{tpu_custom_call.1} parent=11 // pred_region
        _
      $region20: #{tpu_custom_call.1} parent=11 // pred_fallthru
        _
      // Predicated region
      $region21: #{tpu_custom_call.1} parent=11 // pred_check
        %p208 = pneg %p117
      $region22: #{tpu_custom_call.1} parent=11 // pred_check_branch
        %210 = sbr.rel (%p208) target = $region24
      $region23: #{tpu_custom_call.1} parent=11 // pred_region
        _
      $region24: #{tpu_custom_call.1} parent=11 // pred_fallthru
        _
      // Predicated region
      $region25: #{tpu_custom_call.1} parent=11 // pred_check
        %p211 = pneg %p138
      $region26: #{tpu_custom_call.1} parent=11 // pred_check_branch
        %213 = sbr.rel (%p211) target = $region28
      $region27: #{tpu_custom_call.1} parent=11 // pred_region
        _
      $region28: #{tpu_custom_call.1} parent=11 // pred_fallthru
        _
      // Predicated region
      $region29: #{tpu_custom_call.1} parent=11 // pred_check
        %p214 = pneg %p159
      $region30: #{tpu_custom_call.1} parent=11 // pred_check_branch
        %216 = sbr.rel (%p214) target = $region32
      $region31: #{tpu_custom_call.1} parent=11 // pred_region
        _
      $region32: #{tpu_custom_call.1} parent=11 // pred_fallthru
        _
    $region12: #{tpu_custom_call.1} parent=5 // pred_fallthru
      _
    %p217 = scmp.lt.s32.totalorder %s14, 2
    // Predicated region
    $region33: #{tpu_custom_call.1} parent=5 // pred_check
      %p218 = pneg %p217
    $region34: #{tpu_custom_call.1} parent=5 // pred_check_branch
      %220 = sbr.rel (%p218) target = $region36
    $region35: #{tpu_custom_call.1} parent=5 // pred_region
      // Predicated region
      $region37: #{tpu_custom_call.1} parent=35 // pred_check
        %p221 = pneg %p48
      $region38: #{tpu_custom_call.1} parent=35 // pred_check_branch
        %223 = sbr.rel (%p221) target = $region40
      $region39: #{tpu_custom_call.1} parent=35 // pred_region
        %s224 = smul.u32 2, %s22
        %p225 = scmp.lt.s32.totalorder %s21, 1
        %s226 = scalar_select %p225, %s21, 1
        %p227 = scmp.lt.s32.totalorder %s224, 1
        %s228 = scalar_select %p227, %s224, 1
        %s229 = smul.addr %s226, 2
        %s230 = sadd.s32 %s228, %s229
        %s231 = smul.addr %s230, 4
        %s232 = scalar_lea.vmem %s1, %s231
        %s233 = smul.u32 2, %s22
      $region40: #{tpu_custom_call.1} parent=35 // pred_fallthru
        _
    $region36: #{tpu_custom_call.1} parent=5 // pred_fallthru
      _
    %p234 = scmp.le.s32.totalorder 1, %s14
    %p235 = scmp.lt.s32.totalorder %s14, 3
    %p236 = pnand %p234, %p235
    %p237 = pneg %p236
    // Predicated region
    $region41: #{tpu_custom_call.1} parent=5 // pred_check
      _
    $region42: #{tpu_custom_call.1} parent=5 // pred_check_branch
      %239 = sbr.rel (%p236) target = $region44
    $region43: #{tpu_custom_call.1} parent=5 // pred_region
      %s240 = ssub.s32 %s14, 1
      %s241 = smul.u32 2, %s24
      %p242 = scmp.lt.s32.totalorder %s23, 1
      %s243 = scalar_select %p242, %s23, 1
      %p244 = scmp.lt.s32.totalorder %s241, 1
      %s245 = scalar_select %p244, %s241, 1
      %s246 = smul.addr %s243, 2
      %s247 = sadd.s32 %s245, %s246
      %s248 = smul.addr %s247, 4
      %s249 = scalar_lea.vmem %s1, %s248
      %p250 = pneg %p54
      %p251 = pneg %p51
      %p252 = pneg %p75
      %p253 = pneg %p72
      %p254 = pneg %p96
      %p255 = pneg %p93
      %p256 = pneg %p117
      %p257 = pneg %p114
      %p258 = pneg %p138
      %p259 = pneg %p135
      %p260 = pneg %p159
      %p261 = pneg %p156
      %p262 = pneg %p187
      %p263 = pneg %p184
      %s264 = smul.u32 2, %s24
      %p265 = scmp.lt.s32.totalorder %s23, 1
      %s266 = scalar_select %p265, %s23, 1
      %p267 = scmp.lt.s32.totalorder %s264, 1
      %s268 = scalar_select %p267, %s264, 1
      %s269 = smul.addr %s266, 2
      %s270 = sadd.s32 %s268, %s269
      %s271 = smul.addr %s270, 4
      %s272 = scalar_lea.vmem %s7, %s271
      %s273 = smul.u32 2, %s24
      %p274 = scmp.lt.s32.totalorder %s23, 1
      %s275 = scalar_select %p274, %s23, 1
      %p276 = scmp.lt.s32.totalorder %s273, 1
      %s277 = scalar_select %p276, %s273, 1
      %s278 = smul.addr %s275, 2
      %s279 = sadd.s32 %s277, %s278
      %s280 = smul.addr %s279, 4
      %s281 = scalar_lea.vmem %s1, %s280
      %s282 = smul.u32 2, %s24
      %s283 = smul.u32 2, %s24
      %p284 = scmp.lt.s32.totalorder %s23, 1
      %s285 = scalar_select %p284, %s23, 1
      %p286 = scmp.lt.s32.totalorder %s283, 1
      %s287 = scalar_select %p286, %s283, 1
      %s288 = smul.addr %s285, 2
      %s289 = sadd.s32 %s287, %s288
      %s290 = smul.addr %s289, 4
      %s291 = scalar_lea.vmem %s7, %s290
      %s292 = smul.u32 2, %s24
      %v293 = vld [vmem:[%s281] sm:$0x77]
      %s294 = sld [smem:[#allocation3]]
      %v295 = vld [vmem:[%s2] sm:$0xff]
      %v296 = vld [vmem:[%s2 + $0x8] sm:$0xff]
      %v297 = vld [vmem:[%s2 + $0x10] sm:$0xff]
      %v298 = vld [vmem:[%s2 + $0x18] sm:$0xff]
      %v299 = vld [vmem:[%s2 + $0x20] sm:$0xff]
      %v300 = vld [vmem:[%s2 + $0x28] sm:$0xff]
      %v301 = vld [vmem:[%s2 + $0x30] sm:$0xff]
      %v302 = vld [vmem:[%s2 + $0x38] sm:$0xff]
      %v303 = vld [vmem:[%s3] sm:$0xff]
      %v304 = vld [vmem:[%s3 + $0x8] sm:$0xff]
      %v305 = vld [vmem:[%s3 + $0x10] sm:$0xff]
      %v306 = vld [vmem:[%s3 + $0x18] sm:$0xff]
      %v307 = vld [vmem:[%s3 + $0x20] sm:$0xff]
      %v308 = vld [vmem:[%s3 + $0x28] sm:$0xff]
      %v309 = vld [vmem:[%s3 + $0x30] sm:$0xff]
      %v310 = vld [vmem:[%s3 + $0x38] sm:$0xff]
      %312 = vset.pattern.permute.xlu0 0
      %313 = vperm.xlu0 %312, %v303
      %v314 = vpop.permute.xlu0 %313
      %317 = vset.pattern.permute.xlu0 0
      %318 = vperm.xlu0 %317, %v304
      %v319 = vpop.permute.xlu0 %318
      %322 = vset.pattern.permute.xlu0 0
      %323 = vperm.xlu0 %322, %v305
      %v324 = vpop.permute.xlu0 %323
      %327 = vset.pattern.permute.xlu0 0
      %328 = vperm.xlu0 %327, %v306
      %v329 = vpop.permute.xlu0 %328
      %332 = vset.pattern.permute.xlu0 0
      %333 = vperm.xlu0 %332, %v307
      %v334 = vpop.permute.xlu0 %333
      %337 = vset.pattern.permute.xlu0 0
      %338 = vperm.xlu0 %337, %v308
      %v339 = vpop.permute.xlu0 %338
      %342 = vset.pattern.permute.xlu0 0
      %343 = vperm.xlu0 %342, %v309
      %v344 = vpop.permute.xlu0 %343
      %347 = vset.pattern.permute.xlu0 0
      %348 = vperm.xlu0 %347, %v310
      %v349 = vpop.permute.xlu0 %348
      %v352 = vcombine.high %v293, %v293
      %vm353 = vcmask 23552
      %v355 = vsel %vm353, %v295, 0
      %v358 = vsel %vm353, %v296, 0
      %v361 = vsel %vm353, %v297, 0
      %v364 = vsel %vm353, %v298, 0
      %v367 = vsel %vm353, %v299, 0
      %v370 = vsel %vm353, %v300, 0
      %v373 = vsel %vm353, %v301, 0
      %v376 = vsel %vm353, %v302, 0
      %vm378 = vcmask 1042432
      %v379 = vsel %vm378, %v293, 0
      %v381 = vsel %vm378, %v352, 0
      %383 = vmatprep.subr.mxu0 %v381
      %384 = vmatpush1.msra.mxu0 %v379
      %385 = vmatprep.subr.mxu0 0.0
      %386 = vmatpush1.msra.mxu0 0.0
      %387 = vmatprep.subr.mxu0 0.0
      %388 = vmatpush1.msra.mxu0 0.0
      %389 = vmatprep.subr.mxu0 0.0
      %390 = vmatpush1.msra.mxu0 0.0
      %391 = vmatprep.subr.mxu0 0.0
      %392 = vmatpush1.msra.mxu0 0.0
      %393 = vmatprep.subr.mxu0 0.0
      %394 = vmatpush1.msra.mxu0 0.0
      %395 = vmatprep.subr.mxu0 0.0
      %396 = vmatpush1.msra.mxu0 0.0
      %397 = vmatprep.subr.mxu0 0.0
      %398 = vmatpush1.msra.mxu0 0.0
      %399 = vmatprep.subr.mxu0 0.0
      %400 = vmatpush1.msra.mxu0 0.0
      %401 = vmatprep.subr.mxu0 0.0
      %402 = vmatpush1.msra.mxu0 0.0
      %403 = vmatprep.subr.mxu0 0.0
      %404 = vmatpush1.msra.mxu0 0.0
      %405 = vmatprep.subr.mxu0 0.0
      %406 = vmatpush1.msra.mxu0 0.0
      %407 = vmatprep.subr.mxu0 0.0
      %408 = vmatpush1.msra.mxu0 0.0
      %409 = vmatprep.subr.mxu0 0.0
      %410 = vmatpush1.msra.mxu0 0.0
      %411 = vmatprep.subr.mxu0 0.0
      %412 = vmatpush1.msra.mxu0 0.0
      %413 = vmatprep.subr.mxu0 0.0
      %414 = vmatpush1.msra.mxu0 0.0
      %415 = vmatprep.subr.mxu0 0.0
      %416 = vmatpush1.msra.mxu0 0.0
      %417 = vmatprep.subr.mxu0 0.0
      %418 = vmatpush1.msra.mxu0 0.0
      %419 = vmatprep.subr.mxu0 0.0
      %420 = vmatpush1.msra.mxu0 0.0
      %421 = vmatprep.subr.mxu0 0.0
      %422 = vmatpush1.msra.mxu0 0.0
      %423 = vmatprep.subr.mxu0 0.0
      %424 = vmatpush1.msra.mxu0 0.0
      %425 = vmatprep.subr.mxu0 0.0
      %426 = vmatpush1.msra.mxu0 0.0
      %427 = vmatprep.subr.mxu0 0.0
      %428 = vmatpush1.msra.mxu0 0.0
      %429 = vmatprep.subr.mxu0 0.0
      %430 = vmatpush1.msra.mxu0 0.0
      %431 = vmatprep.subr.mxu0 0.0
      %432 = vmatpush1.msra.mxu0 0.0
      %433 = vmatprep.subr.mxu0 0.0
      %434 = vmatpush1.msra.mxu0 0.0
      %435 = vmatprep.subr.mxu0 0.0
      %436 = vmatpush1.msra.mxu0 0.0
      %437 = vmatprep.subr.mxu0 0.0
      %438 = vmatpush1.msra.mxu0 0.0
      %439 = vmatprep.subr.mxu0 0.0
      %440 = vmatpush1.msra.mxu0 0.0
      %441 = vmatprep.subr.mxu0 0.0
      %442 = vmatpush1.msra.mxu0 0.0
      %443 = vmatprep.subr.mxu0 0.0
      %444 = vmatpush1.msra.mxu0 0.0
      %445 = vmatprep.subr.mxu0 0.0
      %446 = vmatpush1.msra.mxu0 0.0
      %447 = vmatprep.mubr.f32.mxu0 0.0
      %448 = vmatmul.mubr.f32.gmra.mrb[0].mxu0 %v355
      %v449 = vpop.f32.mrb[0].mxu0
      %v450 = vadd.f32 %v314, %v449
      %v451 = vpop.f32.mrb[0].mxu0
      %v452 = vadd.f32 %v314, %v451
      %453 = vmatprep.mubr.f32.mxu0 0.0
      %454 = vmatmul.mubr.f32.gmra.mrb[0].mxu0 %v358
      %v455 = vpop.f32.mrb[0].mxu0
      %v456 = vadd.f32 %v319, %v455
      %v457 = vpop.f32.mrb[0].mxu0
      %v458 = vadd.f32 %v319, %v457
      %459 = vmatprep.mubr.f32.mxu0 0.0
      %460 = vmatmul.mubr.f32.gmra.mrb[0].mxu0 %v361
      %v461 = vpop.f32.mrb[0].mxu0
      %v462 = vadd.f32 %v324, %v461
      %v463 = vpop.f32.mrb[0].mxu0
      %v464 = vadd.f32 %v324, %v463
      %465 = vmatprep.mubr.f32.mxu0 0.0
      %466 = vmatmul.mubr.f32.gmra.mrb[0].mxu0 %v364
      %v467 = vpop.f32.mrb[0].mxu0
      %v468 = vadd.f32 %v329, %v467
      %v469 = vpop.f32.mrb[0].mxu0
      %v470 = vadd.f32 %v329, %v469
      %471 = vmatprep.mubr.f32.mxu0 0.0
      %472 = vmatmul.mubr.f32.gmra.mrb[0].mxu0 %v367
      %v473 = vpop.f32.mrb[0].mxu0
      %v474 = vadd.f32 %v334, %v473
      %v475 = vpop.f32.mrb[0].mxu0
      %v476 = vadd.f32 %v334, %v475
      %477 = vmatprep.mubr.f32.mxu0 0.0
      %478 = vmatmul.mubr.f32.gmra.mrb[0].mxu0 %v370
      %v479 = vpop.f32.mrb[0].mxu0
      %v480 = vadd.f32 %v339, %v479
      %v481 = vpop.f32.mrb[0].mxu0
      %v482 = vadd.f32 %v339, %v481
      %483 = vmatprep.mubr.f32.mxu0 0.0
      %484 = vmatmul.mubr.f32.gmra.mrb[0].mxu0 %v373
      %v485 = vpop.f32.mrb[0].mxu0
      %v486 = vadd.f32 %v344, %v485
      %v487 = vpop.f32.mrb[0].mxu0
      %v488 = vadd.f32 %v344, %v487
      %489 = vmatprep.mubr.f32.mxu0 0.0
      %490 = vmatmul.mubr.f32.gmra.mrb[0].mxu0 %v376
      %v491 = vpop.f32.mrb[0].mxu0
      %v492 = vadd.f32 %v349, %v491
      %v493 = vpop.f32.mrb[0].mxu0
      %v494 = vadd.f32 %v349, %v493
      %495 = vdwg.mxu0
      %v496 = vld [vmem:[%s4] sm:$0xff]
      %v497 = vld [vmem:[%s4 + $0x8] sm:$0xff]
      %v498 = vld [vmem:[%s4 + $0x10] sm:$0xff]
      %v499 = vld [vmem:[%s4 + $0x18] sm:$0xff]
      %v500 = vld [vmem:[%s4 + $0x20] sm:$0xff]
      %v501 = vld [vmem:[%s4 + $0x28] sm:$0xff]
      %v502 = vld [vmem:[%s4 + $0x30] sm:$0xff]
      %v503 = vld [vmem:[%s4 + $0x38] sm:$0xff]
      %v504 = vstv %s294
      %v505 = vmul.f32 %v504, %v496
      %v506 = vmul.f32 %v504, %v497
      %v507 = vmul.f32 %v504, %v498
      %v508 = vmul.f32 %v504, %v499
      %v509 = vmul.f32 %v504, %v500
      %v510 = vmul.f32 %v504, %v501
      %v511 = vmul.f32 %v504, %v502
      %v512 = vmul.f32 %v504, %v503
      %514 = vset.pattern.permute.xlu0 0
      %515 = vperm.xlu0 %514, %v505
      %v516 = vpop.permute.xlu0 %515
      %519 = vset.pattern.permute.xlu0 0
      %520 = vperm.xlu0 %519, %v506
      %v521 = vpop.permute.xlu0 %520
      %524 = vset.pattern.permute.xlu0 0
      %525 = vperm.xlu0 %524, %v507
      %v526 = vpop.permute.xlu0 %525
      %529 = vset.pattern.permute.xlu0 0
      %530 = vperm.xlu0 %529, %v508
      %v531 = vpop.permute.xlu0 %530
      %534 = vset.pattern.permute.xlu0 0
      %535 = vperm.xlu0 %534, %v509
      %v536 = vpop.permute.xlu0 %535
      %539 = vset.pattern.permute.xlu0 0
      %540 = vperm.xlu0 %539, %v510
      %v541 = vpop.permute.xlu0 %540
      %544 = vset.pattern.permute.xlu0 0
      %545 = vperm.xlu0 %544, %v511
      %v546 = vpop.permute.xlu0 %545
      %549 = vset.pattern.permute.xlu0 0
      %550 = vperm.xlu0 %549, %v512
      %v551 = vpop.permute.xlu0 %550
      %v553 = vadd.f32 %v450, %v516
      %v554 = vadd.f32 %v452, %v516
      %v555 = vadd.f32 %v456, %v521
      %v556 = vadd.f32 %v458, %v521
      %v557 = vadd.f32 %v462, %v526
      %v558 = vadd.f32 %v464, %v526
      %v559 = vadd.f32 %v468, %v531
      %v560 = vadd.f32 %v470, %v531
      %v561 = vadd.f32 %v474, %v536
      %v562 = vadd.f32 %v476, %v536
      %v563 = vadd.f32 %v480, %v541
      %v564 = vadd.f32 %v482, %v541
      %v565 = vadd.f32 %v486, %v546
      %v566 = vadd.f32 %v488, %v546
      %v567 = vadd.f32 %v492, %v551
      %v568 = vadd.f32 %v494, %v551
      %vm569 = vcmp.ge.f32.partialorder %v553, 0.0
      %vm570 = vcmp.ge.f32.partialorder %v554, 0.0
      %vm571 = vcmp.ge.f32.partialorder %v555, 0.0
      %vm572 = vcmp.ge.f32.partialorder %v556, 0.0
      %vm573 = vcmp.ge.f32.partialorder %v557, 0.0
      %vm574 = vcmp.ge.f32.partialorder %v558, 0.0
      %vm575 = vcmp.ge.f32.partialorder %v559, 0.0
      %vm576 = vcmp.ge.f32.partialorder %v560, 0.0
      %vm577 = vcmp.ge.f32.partialorder %v561, 0.0
      %vm578 = vcmp.ge.f32.partialorder %v562, 0.0
      %vm579 = vcmp.ge.f32.partialorder %v563, 0.0
      %vm580 = vcmp.ge.f32.partialorder %v564, 0.0
      %vm581 = vcmp.ge.f32.partialorder %v565, 0.0
      %vm582 = vcmp.ge.f32.partialorder %v566, 0.0
      %vm583 = vcmp.ge.f32.partialorder %v567, 0.0
      %vm584 = vcmp.ge.f32.partialorder %v568, 0.0
      %v585 = vmul.f32 %v553, 0.01
      %v586 = vmul.f32 %v554, 0.01
      %v587 = vmul.f32 %v555, 0.01
      %v588 = vmul.f32 %v556, 0.01
      %v589 = vmul.f32 %v557, 0.01
      %v590 = vmul.f32 %v558, 0.01
      %v591 = vmul.f32 %v559, 0.01
      %v592 = vmul.f32 %v560, 0.01
      %v593 = vmul.f32 %v561, 0.01
      %v594 = vmul.f32 %v562, 0.01
      %v595 = vmul.f32 %v563, 0.01
      %v596 = vmul.f32 %v564, 0.01
      %v597 = vmul.f32 %v565, 0.01
      %v598 = vmul.f32 %v566, 0.01
      %v599 = vmul.f32 %v567, 0.01
      %v600 = vmul.f32 %v568, 0.01
      %v601 = vsel %vm569, %v553, %v585
      %v602 = vsel %vm570, %v554, %v586
      %v603 = vsel %vm571, %v555, %v587
      %v604 = vsel %vm572, %v556, %v588
      %v605 = vsel %vm573, %v557, %v589
      %v606 = vsel %vm574, %v558, %v590
      %v607 = vsel %vm575, %v559, %v591
      %v608 = vsel %vm576, %v560, %v592
      %v609 = vsel %vm577, %v561, %v593
      %v610 = vsel %vm578, %v562, %v594
      %v611 = vsel %vm579, %v563, %v595
      %v612 = vsel %vm580, %v564, %v596
      %v613 = vsel %vm581, %v565, %v597
      %v614 = vsel %vm582, %v566, %v598
      %v615 = vsel %vm583, %v567, %v599
      %v616 = vsel %vm584, %v568, %v600
      %v617 = vld [vmem:[%s5] sm:$0x7]
      %v618 = vld [vmem:[%s6] sm:$0x7]
      %620 = vset.pattern.permute.xlu0 0
      %621 = vperm.xlu0 %620, %v618
      %v622 = vpop.permute.xlu0 %621
      %vm624 = vcmask 523264
      %v626 = vsel %vm624, %v617, 0
      %628 = vmatprep.subr.mxu0 %v602
      %629 = vmatpush1.msra.mxu0 %v601
      %630 = vmatprep.subr.mxu0 %v604
      %631 = vmatpush1.msra.mxu0 %v603
      %632 = vmatprep.subr.mxu0 %v606
      %633 = vmatpush1.msra.mxu0 %v605
      %634 = vmatprep.subr.mxu0 %v608
      %635 = vmatpush1.msra.mxu0 %v607
      %636 = vmatprep.subr.mxu0 %v610
      %637 = vmatpush1.msra.mxu0 %v609
      %638 = vmatprep.subr.mxu0 %v612
      %639 = vmatpush1.msra.mxu0 %v611
      %640 = vmatprep.subr.mxu0 %v614
      %641 = vmatpush1.msra.mxu0 %v613
      %642 = vmatprep.subr.mxu0 %v616
      %643 = vmatpush1.msra.mxu0 %v615
      %644 = vmatprep.subr.mxu0 0.0
      %645 = vmatpush1.msra.mxu0 0.0
      %646 = vmatprep.subr.mxu0 0.0
      %647 = vmatpush1.msra.mxu0 0.0
      %648 = vmatprep.subr.mxu0 0.0
      %649 = vmatpush1.msra.mxu0 0.0
      %650 = vmatprep.subr.mxu0 0.0
      %651 = vmatpush1.msra.mxu0 0.0
      %652 = vmatprep.subr.mxu0 0.0
      %653 = vmatpush1.msra.mxu0 0.0
      %654 = vmatprep.subr.mxu0 0.0
      %655 = vmatpush1.msra.mxu0 0.0
      %656 = vmatprep.subr.mxu0 0.0
      %657 = vmatpush1.msra.mxu0 0.0
      %658 = vmatprep.subr.mxu0 0.0
      %659 = vmatpush1.msra.mxu0 0.0
      %660 = vmatprep.subr.mxu0 0.0
      %661 = vmatpush1.msra.mxu0 0.0
      %662 = vmatprep.subr.mxu0 0.0
      %663 = vmatpush1.msra.mxu0 0.0
      %664 = vmatprep.subr.mxu0 0.0
      %665 = vmatpush1.msra.mxu0 0.0
      %666 = vmatprep.subr.mxu0 0.0
      %667 = vmatpush1.msra.mxu0 0.0
      %668 = vmatprep.subr.mxu0 0.0
      %669 = vmatpush1.msra.mxu0 0.0
      %670 = vmatprep.subr.mxu0 0.0
      %671 = vmatpush1.msra.mxu0 0.0
      %672 = vmatprep.subr.mxu0 0.0
      %673 = vmatpush1.msra.mxu0 0.0
      %674 = vmatprep.subr.mxu0 0.0
      %675 = vmatpush1.msra.mxu0 0.0
      %676 = vmatprep.subr.mxu0 0.0
      %677 = vmatpush1.msra.mxu0 0.0
      %678 = vmatprep.subr.mxu0 0.0
      %679 = vmatpush1.msra.mxu0 0.0
      %680 = vmatprep.subr.mxu0 0.0
      %681 = vmatpush1.msra.mxu0 0.0
      %682 = vmatprep.subr.mxu0 0.0
      %683 = vmatpush1.msra.mxu0 0.0
      %684 = vmatprep.subr.mxu0 0.0
      %685 = vmatpush1.msra.mxu0 0.0
      %686 = vmatprep.subr.mxu0 0.0
      %687 = vmatpush1.msra.mxu0 0.0
      %688 = vmatprep.subr.mxu0 0.0
      %689 = vmatpush1.msra.mxu0 0.0
      %690 = vmatprep.subr.mxu0 0.0
      %691 = vmatpush1.msra.mxu0 0.0
      %692 = vmatprep.mubr.f32.mxu0 0.0
      %693 = vmatmul.mubr.f32.gmra.mrb[0].mxu0 %v626
      %v694 = vpop.f32.mrb[0].mxu0
      %v695 = vadd.f32 %v622, %v694
      %v696 = vpop.f32.mrb[0].mxu0
      %v697 = vadd.f32 %v622, %v696
      %698 = vdwg.mxu0
      %v701 = vcombine.low %v695, %v697
      %703 = vst [vmem:[%s291] sm:$0x77] %v701
      %s704 = smul.u32 2, %s24
      %p705 = scmp.lt.s32.totalorder %s23, 1
      %s706 = scalar_select %p705, %s23, 1
      %p707 = scmp.lt.s32.totalorder %s704, 1
      %s708 = scalar_select %p707, %s704, 1
      %s709 = smul.addr %s706, 2
      %s710 = sadd.s32 %s708, %s709
      %s711 = smul.addr %s710, 4
      %s712 = scalar_lea.vmem %s7, %s711
      // Predicated region
      $region45: #{tpu_custom_call.1} parent=43 // pred_check
        %p713 = pneg %p184
      $region46: #{tpu_custom_call.1} parent=43 // pred_check_branch
        %715 = sbr.rel (%p713) target = $region48
      $region47: #{tpu_custom_call.1} parent=43 // pred_region
        %s716 = smul.u32 2, %s24
      $region48: #{tpu_custom_call.1} parent=43 // pred_fallthru
        _
    $region44: #{tpu_custom_call.1} parent=5 // pred_fallthru
      _
    %p717 = scmp.le.s32.totalorder 2, %s14
    // Predicated region
    $region49: #{tpu_custom_call.1} parent=5 // pred_check
      %p718 = pneg %p717
    $region50: #{tpu_custom_call.1} parent=5 // pred_check_branch
      %720 = sbr.rel (%p718) target = $region52
    $region51: #{tpu_custom_call.1} parent=5 // pred_region
      %s721 = ssub.s32 %s14, 2
      // Predicated region
      $region53: #{tpu_custom_call.1} parent=51 // pred_check
        %p722 = pneg %p190
      $region54: #{tpu_custom_call.1} parent=51 // pred_check_branch
        %724 = sbr.rel (%p722) target = $region56
      $region55: #{tpu_custom_call.1} parent=51 // pred_region
        %s725 = smul.u32 2, %s26
        %p726 = scmp.lt.s32.totalorder %s25, 1
        %s727 = scalar_select %p726, %s25, 1
        %p728 = scmp.lt.s32.totalorder %s725, 1
        %s729 = scalar_select %p728, %s725, 1
        %s730 = smul.addr %s727, 2
        %s731 = sadd.s32 %s729, %s730
        %s732 = smul.addr %s731, 4
        %s733 = scalar_lea.vmem %s7, %s732
      $region56: #{tpu_custom_call.1} parent=51 // pred_fallthru
        _
    $region52: #{tpu_custom_call.1} parent=5 // pred_fallthru
      _
  $region6: #{tpu_custom_call.1} parent=0 // loop_footer
    %s18 = sadd.s32 1, %s14
  $region7: #{tpu_custom_call.1} parent=0 // loop_footer_branch
    %13 = sbr.rel target = $region3
  $region8: #{tpu_custom_call.1} parent=0 // loop_exit
    _

</llo_original>
